<compile_context>
chip_gen: v7x
topology: tpu7x:2x2x1
jax: 0.10.0
libtpu: 0.0.40
codegen_flags: <defaults>
</compile_context>

<pallas_src>
import functools

import jax
import jax.numpy as jnp
from jax.experimental import pallas as pl
from jax.experimental.pallas import tpu as pltpu


def mean_model_kernel(x_ref, w_ref, b_ref, o_ref, *, inv_n):
    """One batch tile: o = x @ mean_n(W_n) + mean_n(b_n).

    x_ref: [tile_b, D_in]      w_ref: [N, D_in, D_out]
    b_ref: [N, 1, D_out]       o_ref: [tile_b, D_out]
    """
    n_models = w_ref.shape[0]

    # Unrolled member reduction (VPU elementwise adds; N is small & static).
    w_sum = w_ref[0]
    b_sum = b_ref[0]
    for n in range(1, n_models):
        w_sum = w_sum + w_ref[n]
        b_sum = b_sum + b_ref[n]
    w_mean = w_sum * inv_n            # [D_in, D_out]
    b_mean = b_sum * inv_n            # [1, D_out]

    # Single MXU matmul with f32 accumulation, bias added on the VPU.
    y = jnp.dot(x_ref[...], w_mean, preferred_element_type=jnp.float32)
    o_ref[...] = (y + b_mean.astype(jnp.float32)).astype(o_ref.dtype)


def mean_model_forward(x, w_stack, b_stack, *, tile_b=None):
    """x: [B, D_in], w_stack: [N, D_in, D_out], b_stack: [N, 1, D_out]."""
    n_models, d_in, d_out = w_stack.shape
    batch = x.shape[0]
    tile_b = batch if tile_b is None else tile_b

    kernel = functools.partial(mean_model_kernel, inv_n=1.0 / float(n_models))

    return pl.pallas_call(
        kernel,
        out_shape=jax.ShapeDtypeStruct((batch, d_out), x.dtype),
        grid_spec=pltpu.PrefetchScalarGridSpec(
            num_scalar_prefetch=0,
            grid=(pl.cdiv(batch, tile_b),),
            in_specs=[
                # batch tile i of x
                pl.BlockSpec((tile_b, d_in), lambda i: (i, 0)),
                # full parameter stacks, constant block index -> DMA'd once
                pl.BlockSpec((n_models, d_in, d_out), lambda i: (0, 0, 0)),
                pl.BlockSpec((n_models, 1, d_out), lambda i: (0, 0, 0)),
            ],
            out_specs=pl.BlockSpec((tile_b, d_out), lambda i: (i, 0)),
        ),
        compiler_params=pltpu.CompilerParams(
            # batch tiles are independent -> shard across v7x's two TCs
            dimension_semantics=("parallel",),
        ),
    )(x, w_stack, b_stack)


if __name__ == "__main__":
    key = jax.random.PRNGKey(0)
    k_x, k_w, k_b = jax.random.split(key, 3)

    N_MODELS = 3     # MeanModel(*models) with 3 Linear member models
    BATCH = 8
    D_IN = 128
    D_OUT = 128

    x = jax.random.normal(k_x, (BATCH, D_IN), dtype=jnp.float32)
    # deterministic synthetic parameters for the member Linear models
    w_stack = jax.random.normal(k_w, (N_MODELS, D_IN, D_OUT), dtype=jnp.float32) * 0.02
    b_stack = jax.random.normal(k_b, (N_MODELS, 1, D_OUT), dtype=jnp.float32) * 0.02

    out = mean_model_forward(x, w_stack, b_stack)
    out = jax.block_until_ready(out)

    # pure-JAX reference: sum(model_n(x)) / N
    ref = jnp.mean(jnp.einsum("bi,nio->nbo", x, w_stack) + b_stack, axis=0)
    assert out.shape == (BATCH, D_OUT)
    assert jnp.allclose(out, ref, atol=1e-4, rtol=1e-4), float(
        jnp.max(jnp.abs(out - ref))
    )

    print("KERNEL_OK")
</pallas_src>

<mosaic_0001>
module attributes {stable_mosaic.version = 11 : i64} {
  func.func @mean_model_kernel(%arg0: i32, %arg1: memref<8x128xf32, #tpu.memory_space<vmem>>, %arg2: memref<3x128x128xf32, #tpu.memory_space<vmem>>, %arg3: memref<3x1x128xf32, #tpu.memory_space<vmem>>, %arg4: memref<8x128xf32, #tpu.memory_space<vmem>>) attributes {dimension_semantics = [#tpu.dimension_semantics<parallel>], iteration_bounds = array<i64: 1>, scalar_prefetch = 0 : i64, scratch_operands = 0 : i64, tpu.core_type = #tpu.core_type<tc>, window_params = [{transform_indices = @transform_0, window_bounds = array<i64: 8, 128>}, {pipeline_mode = #tpu.pipeline_mode<synchronous>, transform_indices = @transform_1, window_bounds = array<i64: 3, 128, 128>}, {pipeline_mode = #tpu.pipeline_mode<synchronous>, transform_indices = @transform_2, window_bounds = array<i64: 3, 1, 128>}, {transform_indices = @transform_3, window_bounds = array<i64: 8, 128>}]} {
    %c0 = arith.constant 0 : index
    %c0_0 = arith.constant 0 : index
    %c0_1 = arith.constant 0 : index
    %0 = vector.load %arg2[%c0, %c0_0, %c0_1] : memref<3x128x128xf32, #tpu.memory_space<vmem>>, vector<1x128x128xf32>
    %1 = vector.shape_cast %0 : vector<1x128x128xf32> to vector<128x128xf32>
    %c0_2 = arith.constant 0 : index
    %c0_3 = arith.constant 0 : index
    %c0_4 = arith.constant 0 : index
    %2 = vector.load %arg3[%c0_2, %c0_3, %c0_4] : memref<3x1x128xf32, #tpu.memory_space<vmem>>, vector<1x1x128xf32>
    %3 = vector.shape_cast %2 : vector<1x1x128xf32> to vector<1x128xf32>
    %c1 = arith.constant 1 : index
    %c0_5 = arith.constant 0 : index
    %c0_6 = arith.constant 0 : index
    %4 = vector.load %arg2[%c1, %c0_5, %c0_6] : memref<3x128x128xf32, #tpu.memory_space<vmem>>, vector<1x128x128xf32>
    %5 = vector.shape_cast %4 : vector<1x128x128xf32> to vector<128x128xf32>
    %6 = arith.addf %1, %5 : vector<128x128xf32>
    %c1_7 = arith.constant 1 : index
    %c0_8 = arith.constant 0 : index
    %c0_9 = arith.constant 0 : index
    %7 = vector.load %arg3[%c1_7, %c0_8, %c0_9] : memref<3x1x128xf32, #tpu.memory_space<vmem>>, vector<1x1x128xf32>
    %8 = vector.shape_cast %7 : vector<1x1x128xf32> to vector<1x128xf32>
    %9 = arith.addf %3, %8 : vector<1x128xf32>
    %c2 = arith.constant 2 : index
    %c0_10 = arith.constant 0 : index
    %c0_11 = arith.constant 0 : index
    %10 = vector.load %arg2[%c2, %c0_10, %c0_11] : memref<3x128x128xf32, #tpu.memory_space<vmem>>, vector<1x128x128xf32>
    %11 = vector.shape_cast %10 : vector<1x128x128xf32> to vector<128x128xf32>
    %12 = arith.addf %6, %11 : vector<128x128xf32>
    %c2_12 = arith.constant 2 : index
    %c0_13 = arith.constant 0 : index
    %c0_14 = arith.constant 0 : index
    %13 = vector.load %arg3[%c2_12, %c0_13, %c0_14] : memref<3x1x128xf32, #tpu.memory_space<vmem>>, vector<1x1x128xf32>
    %14 = vector.shape_cast %13 : vector<1x1x128xf32> to vector<1x128xf32>
    %15 = arith.addf %9, %14 : vector<1x128xf32>
    %cst = arith.constant 0.333333343 : f32
    %16 = vector.broadcast %cst : f32 to vector<128x128xf32>
    %17 = arith.mulf %12, %16 : vector<128x128xf32>
    %cst_15 = arith.constant 0.333333343 : f32
    %18 = vector.broadcast %cst_15 : f32 to vector<1x128xf32>
    %19 = arith.mulf %15, %18 : vector<1x128xf32>
    %c0_16 = arith.constant 0 : index
    %c0_17 = arith.constant 0 : index
    %20 = vector.load %arg1[%c0_16, %c0_17] : memref<8x128xf32, #tpu.memory_space<vmem>>, vector<8x128xf32>
    %cst_18 = arith.constant dense<0.000000e+00> : vector<8x128xf32>
    %21 = tpu.matmul %20, %17, %cst_18 {dimension_numbers = #tpu.dot_dimension_numbers<[1], [0], [0], [1], [0, 0, 1, 1], [], []>} : vector<8x128xf32>, vector<128x128xf32>, vector<8x128xf32> -> vector<8x128xf32>
    %22 = vector.broadcast %19 : vector<1x128xf32> to vector<8x128xf32>
    %23 = arith.addf %21, %22 : vector<8x128xf32>
    %c0_19 = arith.constant 0 : index
    %c0_20 = arith.constant 0 : index
    %24 = vector.load %arg4[%c0_19, %c0_20] : memref<8x128xf32, #tpu.memory_space<vmem>>, vector<8x128xf32>
    tpu.vector_store %arg4[%c0_19, %c0_20], %23 {strides = array<i32>} : memref<8x128xf32, #tpu.memory_space<vmem>>, vector<8x128xf32>,
    return
  }
  func.func @transform_0(%arg0: i32) -> (i32, i32) {
    %c0_i32 = arith.constant 0 : i32
    %c0_i32_0 = arith.constant 0 : i32
    return %arg0, %c0_i32 : i32, i32
  }
  func.func @transform_1(%arg0: i32) -> (i32, i32, i32) {
    %c0_i32 = arith.constant 0 : i32
    %c0_i32_0 = arith.constant 0 : i32
    %c0_i32_1 = arith.constant 0 : i32
    %c0_i32_2 = arith.constant 0 : i32
    return %c0_i32, %c0_i32_0, %c0_i32_1 : i32, i32, i32
  }
  func.func @transform_2(%arg0: i32) -> (i32, i32, i32) {
    %c0_i32 = arith.constant 0 : i32
    %c0_i32_0 = arith.constant 0 : i32
    %c0_i32_1 = arith.constant 0 : i32
    %c0_i32_2 = arith.constant 0 : i32
    return %c0_i32, %c0_i32_0, %c0_i32_1 : i32, i32, i32
  }
  func.func @transform_3(%arg0: i32) -> (i32, i32) {
    %c0_i32 = arith.constant 0 : i32
    %c0_i32_0 = arith.constant 0 : i32
    return %arg0, %c0_i32 : i32, i32
  }
}

</mosaic_0001>

<llo_original>
// kernel: tpu_custom_call.1
$region0: #{tpu_custom_call.1}
  #allocation0 [shape = 'u32[]', space=smem, size = 0x4, offset = 0x4, fixed_abs, tag = 'smem constant byte address 0x4 - core index']
  #allocation1 [shape = 'u32[144,128]{1,0:T(1,128)}', space=vmem, size = 0x12000, scoped, tag = 'internal scratch']
  %s0 = inlined_call_operand.hbm [shape: f32[8,128], index: 0, kind: input, shape index: {}]
  %s1 = inlined_call_operand.hbm [shape: f32[3,128,128], index: 1, kind: input, shape index: {}]
  %s2 = inlined_call_operand.vmem [shape: f32[3,1,128], index: 2, kind: input, shape index: {}]
  %s3 = inlined_call_operand.hbm [shape: f32[8,128], index: 3, kind: output, shape index: {}]
  %s4 = sld [smem:[#allocation0]]
  $region30: #{tpu_custom_call.1} parent=0
    _
  %s6 = ssub.s32 1, %s4
  %s7 = scalar_select 0, %s6, %s4
  $region1: #{tpu_custom_call.1} parent=0
    #allocation2 [shape = 'u8[4096]{0}', space=vmem, size = 0x1000, scoped, tag = 'input window, operand 0, single buffered']
    #allocation3 [shape = 's32[1]{0}', space=sflag, size = 0x4, scoped, tag = 'scoped memory for tpu_custom_call.1']
    #allocation4 [shape = 's32[1]{0}', space=sflag, size = 0x4, scoped, tag = 'scoped memory for tpu_custom_call.1']
    #allocation5 [shape = 'u8[196608]{0}', space=vmem, size = 0x30000, scoped, tag = 'input window, operand 1, single buffered']
    #allocation6 [shape = 's32[1]{0}', space=sflag, size = 0x4, scoped, tag = 'scoped memory for tpu_custom_call.1']
    #allocation7 [shape = 'u8[4096]{0}', space=vmem, size = 0x1000, scoped, tag = 'output window, operand 0, single buffered']
    %8 = vsyncpa [#allocation3], 0
    %9 = vsyncpa [#allocation6], 0
    %10 = vsyncpa [#allocation4], 0
    // Predicated region
    $region2: #{tpu_custom_call.1} parent=1 // pred_check
      _
    $region3: #{tpu_custom_call.1} parent=1 // pred_check_branch
      %12 = sbr.rel (0) target = $region5
    $region4: #{tpu_custom_call.1} parent=1 // pred_region
      %s14 = ssub.s32 128, 128
      %15 = vsyncadd [#allocation3], %s14
      %s17 = sshll.u32 [#allocation2], 4
      %s18 = int_to_ptr.vmem [resolvable:$true] %s17
      %20 = dma.hbm_to_vmem [thread:$0]  %s0, 128, %s18, [#allocation3]
    $region5: #{tpu_custom_call.1} parent=1 // pred_fallthru
      _
    // Predicated region
    $region6: #{tpu_custom_call.1} parent=1 // pred_check
      _
    $region7: #{tpu_custom_call.1} parent=1 // pred_check_branch
      %22 = sbr.rel (0) target = $region9
    $region8: #{tpu_custom_call.1} parent=1 // pred_region
      %s24 = ssub.s32 6144, 6144
      %25 = vsyncadd [#allocation6], %s24
      %s26 = sshll.u32 [#allocation5], 4
      %s27 = int_to_ptr.vmem [resolvable:$true] %s26
      %32 = dma.hbm_to_vmem [thread:$0]  %s1, 6144, %s27, [#allocation6], 128, 128, 8
    $region9: #{tpu_custom_call.1} parent=1 // pred_fallthru
      _
    // Predicated region
    $region10: #{tpu_custom_call.1} parent=1 // pred_check
      _
    $region11: #{tpu_custom_call.1} parent=1 // pred_check_branch
      %34 = sbr.rel (0) target = $region13
    $region12: #{tpu_custom_call.1} parent=1 // pred_region
      _
    $region13: #{tpu_custom_call.1} parent=1 // pred_fallthru
      _
    // Predicated region
    $region14: #{tpu_custom_call.1} parent=1 // pred_check
      _
    $region15: #{tpu_custom_call.1} parent=1 // pred_check_branch
      %36 = sbr.rel (0) target = $region17
    $region16: #{tpu_custom_call.1} parent=1 // pred_region
      %37 = dma.done [#allocation3], 128
    $region17: #{tpu_custom_call.1} parent=1 // pred_fallthru
      _
    // Predicated region
    $region18: #{tpu_custom_call.1} parent=1 // pred_check
      _
    $region19: #{tpu_custom_call.1} parent=1 // pred_check_branch
      %39 = sbr.rel (0) target = $region21
    $region20: #{tpu_custom_call.1} parent=1 // pred_region
      %40 = dma.done [#allocation6], 6144
    $region21: #{tpu_custom_call.1} parent=1 // pred_fallthru
      _
    %v41 = vld [vmem:[#allocation5] sm:$0xff]
    %v42 = vld [vmem:[#allocation5 + $0x8] sm:$0xff]
    %v43 = vld [vmem:[#allocation5 + $0x10] sm:$0xff]
    %v44 = vld [vmem:[#allocation5 + $0x18] sm:$0xff]
    %v45 = vld [vmem:[#allocation5 + $0x20] sm:$0xff]
    %v46 = vld [vmem:[#allocation5 + $0x28] sm:$0xff]
    %v47 = vld [vmem:[#allocation5 + $0x30] sm:$0xff]
    %v48 = vld [vmem:[#allocation5 + $0x38] sm:$0xff]
    %v49 = vld [vmem:[#allocation5 + $0x40] sm:$0xff]
    %v50 = vld [vmem:[#allocation5 + $0x48] sm:$0xff]
    %v51 = vld [vmem:[#allocation5 + $0x50] sm:$0xff]
    %v52 = vld [vmem:[#allocation5 + $0x58] sm:$0xff]
    %v53 = vld [vmem:[#allocation5 + $0x60] sm:$0xff]
    %v54 = vld [vmem:[#allocation5 + $0x68] sm:$0xff]
    %v55 = vld [vmem:[#allocation5 + $0x70] sm:$0xff]
    %v56 = vld [vmem:[#allocation5 + $0x78] sm:$0xff]
    %v57 = vld [vmem:[%s2] sm:$0x1]
    %s58 = scalar_lea.vmem [#allocation5], 128
    %v59 = vld [vmem:[%s58] sm:$0xff]
    %v60 = vld [vmem:[%s58 + $0x8] sm:$0xff]
    %v61 = vld [vmem:[%s58 + $0x10] sm:$0xff]
    %v62 = vld [vmem:[%s58 + $0x18] sm:$0xff]
    %v63 = vld [vmem:[%s58 + $0x20] sm:$0xff]
    %v64 = vld [vmem:[%s58 + $0x28] sm:$0xff]
    %v65 = vld [vmem:[%s58 + $0x30] sm:$0xff]
    %v66 = vld [vmem:[%s58 + $0x38] sm:$0xff]
    %v67 = vld [vmem:[%s58 + $0x40] sm:$0xff]
    %v68 = vld [vmem:[%s58 + $0x48] sm:$0xff]
    %v69 = vld [vmem:[%s58 + $0x50] sm:$0xff]
    %v70 = vld [vmem:[%s58 + $0x58] sm:$0xff]
    %v71 = vld [vmem:[%s58 + $0x60] sm:$0xff]
    %v72 = vld [vmem:[%s58 + $0x68] sm:$0xff]
    %v73 = vld [vmem:[%s58 + $0x70] sm:$0xff]
    %v74 = vld [vmem:[%s58 + $0x78] sm:$0xff]
    %v75 = vadd.f32 %v41, %v59
    %v76 = vadd.f32 %v42, %v60
    %v77 = vadd.f32 %v43, %v61
    %v78 = vadd.f32 %v44, %v62
    %v79 = vadd.f32 %v45, %v63
    %v80 = vadd.f32 %v46, %v64
    %v81 = vadd.f32 %v47, %v65
    %v82 = vadd.f32 %v48, %v66
    %v83 = vadd.f32 %v49, %v67
    %v84 = vadd.f32 %v50, %v68
    %v85 = vadd.f32 %v51, %v69
    %v86 = vadd.f32 %v52, %v70
    %v87 = vadd.f32 %v53, %v71
    %v88 = vadd.f32 %v54, %v72
    %v89 = vadd.f32 %v55, %v73
    %v90 = vadd.f32 %v56, %v74
    %s91 = scalar_lea.vmem %s2, 1
    %v92 = vld [vmem:[%s91] sm:$0x1]
    %v93 = vadd.f32 %v57, %v92
    %s94 = scalar_lea.vmem [#allocation5], 256
    %v95 = vld [vmem:[%s94] sm:$0xff]
    %v96 = vld [vmem:[%s94 + $0x8] sm:$0xff]
    %v97 = vld [vmem:[%s94 + $0x10] sm:$0xff]
    %v98 = vld [vmem:[%s94 + $0x18] sm:$0xff]
    %v99 = vld [vmem:[%s94 + $0x20] sm:$0xff]
    %v100 = vld [vmem:[%s94 + $0x28] sm:$0xff]
    %v101 = vld [vmem:[%s94 + $0x30] sm:$0xff]
    %v102 = vld [vmem:[%s94 + $0x38] sm:$0xff]
    %v103 = vld [vmem:[%s94 + $0x40] sm:$0xff]
    %v104 = vld [vmem:[%s94 + $0x48] sm:$0xff]
    %v105 = vld [vmem:[%s94 + $0x50] sm:$0xff]
    %v106 = vld [vmem:[%s94 + $0x58] sm:$0xff]
    %v107 = vld [vmem:[%s94 + $0x60] sm:$0xff]
    %v108 = vld [vmem:[%s94 + $0x68] sm:$0xff]
    %v109 = vld [vmem:[%s94 + $0x70] sm:$0xff]
    %v110 = vld [vmem:[%s94 + $0x78] sm:$0xff]
    %v111 = vadd.f32 %v75, %v95
    %v112 = vadd.f32 %v76, %v96
    %v113 = vadd.f32 %v77, %v97
    %v114 = vadd.f32 %v78, %v98
    %v115 = vadd.f32 %v79, %v99
    %v116 = vadd.f32 %v80, %v100
    %v117 = vadd.f32 %v81, %v101
    %v118 = vadd.f32 %v82, %v102
    %v119 = vadd.f32 %v83, %v103
    %v120 = vadd.f32 %v84, %v104
    %v121 = vadd.f32 %v85, %v105
    %v122 = vadd.f32 %v86, %v106
    %v123 = vadd.f32 %v87, %v107
    %v124 = vadd.f32 %v88, %v108
    %v125 = vadd.f32 %v89, %v109
    %v126 = vadd.f32 %v90, %v110
    %s127 = scalar_lea.vmem %s2, 2
    %v128 = vld [vmem:[%s127] sm:$0x1]
    %v129 = vadd.f32 %v93, %v128
    %v130 = vmul.f32 %v111, 0.33333334
    %v131 = vmul.f32 %v112, 0.33333334
    %v132 = vmul.f32 %v113, 0.33333334
    %v133 = vmul.f32 %v114, 0.33333334
    %v134 = vmul.f32 %v115, 0.33333334
    %v135 = vmul.f32 %v116, 0.33333334
    %v136 = vmul.f32 %v117, 0.33333334
    %v137 = vmul.f32 %v118, 0.33333334
    %v138 = vmul.f32 %v119, 0.33333334
    %v139 = vmul.f32 %v120, 0.33333334
    %v140 = vmul.f32 %v121, 0.33333334
    %v141 = vmul.f32 %v122, 0.33333334
    %v142 = vmul.f32 %v123, 0.33333334
    %v143 = vmul.f32 %v124, 0.33333334
    %v144 = vmul.f32 %v125, 0.33333334
    %v145 = vmul.f32 %v126, 0.33333334
    %v146 = vmul.f32 %v129, 0.33333334
    %v147 = vld [vmem:[#allocation2] sm:$0xff]
    %v149 = vlaneseq
    %v150 = vshrl.u32 %v149, 7
    %v151 = vsub.s32 0, %v150
    %v152 = vrot.slane %v146, %v151
    %154 = vmatprep.subr.mxu0 0.0
    %155 = vmatpush1.msra.mxu0 %v130
    %156 = vmatprep.subr.mxu0 0.0
    %157 = vmatpush1.msra.mxu0 %v131
    %158 = vmatprep.subr.mxu0 0.0
    %159 = vmatpush1.msra.mxu0 %v132
    %160 = vmatprep.subr.mxu0 0.0
    %161 = vmatpush1.msra.mxu0 %v133
    %162 = vmatprep.subr.mxu0 0.0
    %163 = vmatpush1.msra.mxu0 %v134
    %164 = vmatprep.subr.mxu0 0.0
    %165 = vmatpush1.msra.mxu0 %v135
    %166 = vmatprep.subr.mxu0 0.0
    %167 = vmatpush1.msra.mxu0 %v136
    %168 = vmatprep.subr.mxu0 0.0
    %169 = vmatpush1.msra.mxu0 %v137
    %170 = vmatprep.subr.mxu0 0.0
    %171 = vmatpush1.msra.mxu0 %v138
    %172 = vmatprep.subr.mxu0 0.0
    %173 = vmatpush1.msra.mxu0 %v139
    %174 = vmatprep.subr.mxu0 0.0
    %175 = vmatpush1.msra.mxu0 %v140
    %176 = vmatprep.subr.mxu0 0.0
    %177 = vmatpush1.msra.mxu0 %v141
    %178 = vmatprep.subr.mxu0 0.0
    %179 = vmatpush1.msra.mxu0 %v142
    %180 = vmatprep.subr.mxu0 0.0
    %181 = vmatpush1.msra.mxu0 %v143
    %182 = vmatprep.subr.mxu0 0.0
    %183 = vmatpush1.msra.mxu0 %v144
    %184 = vmatprep.subr.mxu0 0.0
    %185 = vmatpush1.msra.mxu0 %v145
    %186 = vmatprep.subr.mxu0 0.0
    %187 = vmatpush1.msra.mxu0 0.0
    %188 = vmatprep.subr.mxu0 0.0
    %189 = vmatpush1.msra.mxu0 0.0
    %190 = vmatprep.subr.mxu0 0.0
    %191 = vmatpush1.msra.mxu0 0.0
    %192 = vmatprep.subr.mxu0 0.0
    %193 = vmatpush1.msra.mxu0 0.0
    %194 = vmatprep.subr.mxu0 0.0
    %195 = vmatpush1.msra.mxu0 0.0
    %196 = vmatprep.subr.mxu0 0.0
    %197 = vmatpush1.msra.mxu0 0.0
    %198 = vmatprep.subr.mxu0 0.0
    %199 = vmatpush1.msra.mxu0 0.0
    %200 = vmatprep.subr.mxu0 0.0
    %201 = vmatpush1.msra.mxu0 0.0
    %202 = vmatprep.subr.mxu0 0.0
    %203 = vmatpush1.msra.mxu0 0.0
    %204 = vmatprep.subr.mxu0 0.0
    %205 = vmatpush1.msra.mxu0 0.0
    %206 = vmatprep.subr.mxu0 0.0
    %207 = vmatpush1.msra.mxu0 0.0
    %208 = vmatprep.subr.mxu0 0.0
    %209 = vmatpush1.msra.mxu0 0.0
    %210 = vmatprep.subr.mxu0 0.0
    %211 = vmatpush1.msra.mxu0 0.0
    %212 = vmatprep.subr.mxu0 0.0
    %213 = vmatpush1.msra.mxu0 0.0
    %214 = vmatprep.subr.mxu0 0.0
    %215 = vmatpush1.msra.mxu0 0.0
    %216 = vmatprep.subr.mxu0 0.0
    %217 = vmatpush1.msra.mxu0 0.0
    %218 = vmatprep.mubr.f32.mxu0 0.0
    %219 = vmatmul.mubr.f32.gmra.mrb[0].mxu0 %v147
    %v220 = vpop.f32.mrb[0].mxu0
    %v221 = vadd.f32 %v152, %v220
    %v222 = vpop.f32.mrb[0].mxu0
    %223 = vdwg.mxu0
    %224 = vst [vmem:[#allocation7] sm:$0xff] %v221
    // Predicated region
    $region22: #{tpu_custom_call.1} parent=1 // pred_check
      _
    $region23: #{tpu_custom_call.1} parent=1 // pred_check_branch
      %226 = sbr.rel (0) target = $region25
    $region24: #{tpu_custom_call.1} parent=1 // pred_region
      %s228 = ssub.s32 128, 128
      %229 = vsyncadd [#allocation4], %s228
      %s231 = sshll.u32 [#allocation7], 4
      %s232 = int_to_ptr.vmem [resolvable:$true] %s231
      %234 = dma.vmem_to_hbm [thread:$0]  %s232, 128, %s3, [#allocation4]
    $region25: #{tpu_custom_call.1} parent=1 // pred_fallthru
      _
    // Predicated region
    $region26: #{tpu_custom_call.1} parent=1 // pred_check
      _
    $region27: #{tpu_custom_call.1} parent=1 // pred_check_branch
      %236 = sbr.rel (0) target = $region29
    $region28: #{tpu_custom_call.1} parent=1 // pred_region
      %237 = dma.done [#allocation4], 128
    $region29: #{tpu_custom_call.1} parent=1 // pred_fallthru
      _
    %238 = vsyncpa [#allocation3], 1
    %239 = vsyncpa [#allocation6], 1
    %240 = vsyncpa [#allocation4], 1

</llo_original>
